<compile_context>
chip_gen: v7x
topology: tpu7x:2x2x1
jax: 0.10.0
libtpu: 0.0.40
codegen_flags: <defaults>
</compile_context>

<pallas_src>
import jax
import jax.numpy as jnp
from jax import lax
from jax.experimental import pallas as pl
from jax.experimental.pallas import tpu as pltpu

# ---- module-consistent sizes ----
B, S, H = 2, 8, 32       # batch, sequence, hidden_dim
BS = B * S
P = 16                   # config.max_position_embeddings
V = 64                   # vocab / codebook rows (pretrained_codebook)
PAD_TOKEN_ID = 0         # pretrained_config.pad_token_id
LN_EPS = 1e-5            # torch.nn.LayerNorm default eps

OUT_W = 128              # lane-dense merged output width: [hidden | logits | pad]
LOGITS_W = OUT_W - H     # lanes reserved for logits (V real + zero padding)

assert P >= S + 1, "position ids reach S (cumsum starts at 1); need P >= S+1"
assert H + V <= OUT_W, "hidden + vocab must fit in one 128-lane output tile"
assert S & (S - 1) == 0, "xor-based same-sequence test assumes power-of-two S"


# ------------------------------------------------------------------
# Fused kernel:
#   position_ids = cumsum(ids != pad, dim=1) * (ids != pad)
#   hidden = LayerNorm(inputs_embeds + pos_embedding[position_ids])
#   (dropout = identity in eval; frozen LM treated as identity)
#   logits = hidden @ codebook.T
# ------------------------------------------------------------------
def fused_lm_kernel(ids_ref, embeds_ref, params_ref, proj_ref, out_ref):
    # ids_ref    : (1, BS)        int32  flattened (b, s) token ids, lane-major
    # embeds_ref : (BS, H)        f32    flattened inputs_embeds
    # params_ref : (P+2, H)       f32    rows [0:P]=pos_table, [P]=gamma, [P+1]=beta
    # proj_ref   : (H, LOGITS_W)  f32    [codebook.T | zeros]  (packed at init)
    # out_ref    : (BS, OUT_W)    f32    lanes [0:H]=hidden, [H:H+V]=logits, rest 0

    mask_lane = (ids_ref[...] != PAD_TOKEN_ID).astype(jnp.float32)      # (1, BS)
    embeds = embeds_ref[...]                                            # (BS, H)

    # position_ids = cumsum(mask, dim=seq) * mask, computed on VPU/XLU only:
    # block-diagonal lower-triangular keep-mask + lane reductions (no MXU
    # round-trip, no integer divides — (row ^ col) < S  <=>  row//S == col//S).
    row = lax.broadcasted_iota(jnp.int32, (BS, BS), 0)
    col = lax.broadcasted_iota(jnp.int32, (BS, BS), 1)
    same_seq = (row ^ col) < S
    keep = ((col <= row) & same_seq).astype(jnp.float32)                # (BS, BS)
    diag = (col == row).astype(jnp.float32)                             # (BS, BS)
    csum = jnp.sum(keep * mask_lane, axis=-1, keepdims=True)            # (BS, 1)
    mask_row = jnp.sum(diag * mask_lane, axis=-1, keepdims=True)        # (BS, 1)
    # f32 cumsum is exact at these sizes; truncate to int32 position ids.
    pos_ids = (csum * mask_row).astype(jnp.int32)                       # (BS, 1)

    # nn.Embedding lookup as a 2-D one-hot matmul (MXU-friendly gather).
    pos_iota = lax.broadcasted_iota(jnp.int32, (BS, P), 1)
    onehot = (pos_ids == pos_iota).astype(jnp.float32)                  # (BS, P)
    pos_emb = jnp.dot(onehot, params_ref[0:P, :],
                      preferred_element_type=jnp.float32)               # (BS, H)

    # residual add + LayerNorm over the hidden dim (dropout = identity in eval).
    gamma = params_ref[P:P + 1, :]                                      # (1, H)
    beta = params_ref[P + 1:P + 2, :]                                   # (1, H)
    h = embeds + pos_emb
    mean = jnp.mean(h, axis=-1, keepdims=True)
    centered = h - mean
    var = jnp.mean(centered * centered, axis=-1, keepdims=True)
    hidden = centered * lax.rsqrt(var + LN_EPS) * gamma + beta          # (BS, H)

    # TODO(synk): the frozen AutoModelForCausalLM (config.model_path) cannot be
    # reproduced in-script; it is treated as identity over the hidden states
    # (attention_mask would be consumed there).

    # logits = hidden @ codebook.T, with the codebook pre-transposed and
    # zero-padded to LOGITS_W lanes at init — no in-kernel transpose.
    logits_ext = jnp.dot(hidden, proj_ref[...],
                         preferred_element_type=jnp.float32)            # (BS, LOGITS_W)

    # Single (BS, 128) output tile -> one lane-dense output DMA.
    out_ref[:, 0:H] = hidden
    out_ref[:, H:OUT_W] = logits_ext


_VMEM_SPEC = pl.BlockSpec(memory_space=pltpu.MemorySpace.VMEM)


def pack_params(pos_table, ln_gamma, ln_beta, codebook):
    """One-time parameter packing (paid at init, not per forward call)."""
    params = jnp.concatenate(
        [pos_table.astype(jnp.float32),
         ln_gamma.reshape(1, H).astype(jnp.float32),
         ln_beta.reshape(1, H).astype(jnp.float32)], axis=0)            # (P+2, H)
    proj = jnp.concatenate(
        [codebook.astype(jnp.float32).T,                                # (H, V)
         jnp.zeros((H, LOGITS_W - V), jnp.float32)], axis=1)            # (H, LOGITS_W)
    return params, proj


# ------------------------------------------------------------------
# Wrapper (glue: reshapes/slices only; single grid-less pallas_call)
# ------------------------------------------------------------------
@jax.jit
def language_model_forward(inputs_embeds, input_ids, attention_mask, params, proj):
    del attention_mask  # only consumed by the frozen pretrained LM (identity here)

    # NOTE (v7x scale-up): at these toy sizes a grid-less single tile is right;
    # for real (B*S, H, V) add a grid over rows (and V) with
    # dimension_semantics=("parallel", ...) and size tiles against 64 MiB VMEM.
    out = pl.pallas_call(
        fused_lm_kernel,
        out_shape=jax.ShapeDtypeStruct((BS, OUT_W), jnp.float32),
        in_specs=[_VMEM_SPEC] * 4,
        out_specs=_VMEM_SPEC,
    )(input_ids.reshape(1, BS).astype(jnp.int32),
      inputs_embeds.reshape(BS, H).astype(jnp.float32),
      params,
      proj)

    hidden = out[:, :H].reshape(B, S, H)
    logits = out[:, H:H + V].reshape(B, S, V)
    return {"logits": logits,
            "hidden_states": None,
            "attentions": None,
            "last_hidden_states": hidden}


if __name__ == "__main__":
    key = jax.random.PRNGKey(0)
    k_emb, k_ids, k_pos, k_code = jax.random.split(key, 4)

    # deterministic inputs
    inputs_embeds = jax.random.normal(k_emb, (B, S, H), dtype=jnp.float32)
    input_ids = jax.random.randint(k_ids, (B, S), 0, V, dtype=jnp.int32)
    input_ids = input_ids.at[:, -2:].set(PAD_TOKEN_ID)   # padding at the end
    attention_mask = (input_ids != PAD_TOKEN_ID).astype(jnp.float32)

    # deterministic "parameters"
    pos_table = 0.02 * jax.random.normal(k_pos, (P, H), dtype=jnp.float32)
    ln_gamma = jnp.ones((H,), dtype=jnp.float32)
    ln_beta = jnp.zeros((H,), dtype=jnp.float32)
    codebook = jax.random.normal(k_code, (V, H), dtype=jnp.float32)

    params, proj = pack_params(pos_table, ln_gamma, ln_beta, codebook)

    out = language_model_forward(inputs_embeds, input_ids, attention_mask,
                                 params, proj)
    jax.block_until_ready(out)

    assert out["logits"].shape == (B, S, V)
    assert out["last_hidden_states"].shape == (B, S, H)
    assert bool(jnp.all(jnp.isfinite(out["logits"])))
    assert bool(jnp.all(jnp.isfinite(out["last_hidden_states"])))
    print("KERNEL_OK")
</pallas_src>

<mosaic_0001>
module attributes {stable_mosaic.version = 11 : i64} {
  func.func @fused_lm_kernel(%arg0: memref<1x16xi32, #tpu.memory_space<vmem>>, %arg1: memref<16x32xf32, #tpu.memory_space<vmem>>, %arg2: memref<18x32xf32, #tpu.memory_space<vmem>>, %arg3: memref<32x96xf32, #tpu.memory_space<vmem>>, %arg4: memref<16x128xf32, #tpu.memory_space<vmem>>) attributes {dimension_semantics = [], scalar_prefetch = 0 : i64, scratch_operands = 0 : i64, tpu.core_type = #tpu.core_type<tc>} {
    %c0 = arith.constant 0 : index
    %c0_0 = arith.constant 0 : index
    %0 = vector.load %arg0[%c0, %c0_0] : memref<1x16xi32, #tpu.memory_space<vmem>>, vector<1x16xi32>
    %c0_i32 = arith.constant 0 : i32
    %1 = vector.broadcast %c0_i32 : i32 to vector<1x16xi32>
    %2 = arith.cmpi ne, %0, %1 : vector<1x16xi32>
    %3 = arith.extui %2 : vector<1x16xi1> to vector<1x16xi32>
    %4 = arith.sitofp %3 : vector<1x16xi32> to vector<1x16xf32>
    %c0_1 = arith.constant 0 : index
    %c0_2 = arith.constant 0 : index
    %5 = vector.load %arg1[%c0_1, %c0_2] : memref<16x32xf32, #tpu.memory_space<vmem>>, vector<16x32xf32>
    %6 = tpu.iota {dimensions = array<i32: 0>} : vector<16x16xi32>
    %7 = tpu.iota {dimensions = array<i32: 1>} : vector<16x16xi32>
    %8 = arith.xori %6, %7 : vector<16x16xi32>
    %c8_i32 = arith.constant 8 : i32
    %9 = vector.broadcast %c8_i32 : i32 to vector<16x16xi32>
    %10 = arith.cmpi slt, %8, %9 : vector<16x16xi32>
    %11 = arith.cmpi sle, %7, %6 : vector<16x16xi32>
    %12 = arith.andi %11, %10 : vector<16x16xi1>
    %13 = arith.extui %12 : vector<16x16xi1> to vector<16x16xi32>
    %14 = arith.sitofp %13 : vector<16x16xi32> to vector<16x16xf32>
    %15 = arith.cmpi eq, %7, %6 : vector<16x16xi32>
    %16 = arith.extui %15 : vector<16x16xi1> to vector<16x16xi32>
    %17 = arith.sitofp %16 : vector<16x16xi32> to vector<16x16xf32>
    %18 = vector.broadcast %4 : vector<1x16xf32> to vector<16x16xf32>
    %19 = arith.mulf %14, %18 : vector<16x16xf32>
    %cst = arith.constant dense<0.000000e+00> : vector<16xf32>
    %20 = vector.multi_reduction <add>, %19, %cst [1] : vector<16x16xf32> to vector<16xf32>
    %21 = vector.shape_cast %20 : vector<16xf32> to vector<16x1xf32>
    %22 = vector.broadcast %4 : vector<1x16xf32> to vector<16x16xf32>
    %23 = arith.mulf %17, %22 : vector<16x16xf32>
    %cst_3 = arith.constant dense<0.000000e+00> : vector<16xf32>
    %24 = vector.multi_reduction <add>, %23, %cst_3 [1] : vector<16x16xf32> to vector<16xf32>
    %25 = vector.shape_cast %24 : vector<16xf32> to vector<16x1xf32>
    %26 = arith.mulf %21, %25 : vector<16x1xf32>
    %27 = arith.fptosi %26 : vector<16x1xf32> to vector<16x1xi32>
    %28 = tpu.iota {dimensions = array<i32: 1>} : vector<16x16xi32>
    %29 = vector.broadcast %27 : vector<16x1xi32> to vector<16x16xi32>
    %30 = arith.cmpi eq, %29, %28 : vector<16x16xi32>
    %31 = arith.extui %30 : vector<16x16xi1> to vector<16x16xi32>
    %32 = arith.sitofp %31 : vector<16x16xi32> to vector<16x16xf32>
    %c0_4 = arith.constant 0 : index
    %c0_5 = arith.constant 0 : index
    %33 = vector.load %arg2[%c0_4, %c0_5] : memref<18x32xf32, #tpu.memory_space<vmem>>, vector<16x32xf32>
    %cst_6 = arith.constant dense<0.000000e+00> : vector<16x32xf32>
    %34 = tpu.matmul %32, %33, %cst_6 {dimension_numbers = #tpu.dot_dimension_numbers<[1], [0], [0], [1], [0, 0, 1, 1], [], []>} : vector<16x16xf32>, vector<16x32xf32>, vector<16x32xf32> -> vector<16x32xf32>
    %c16 = arith.constant 16 : index
    %c0_7 = arith.constant 0 : index
    %35 = vector.load %arg2[%c16, %c0_7] : memref<18x32xf32, #tpu.memory_space<vmem>>, vector<1x32xf32>
    %c17 = arith.constant 17 : index
    %c0_8 = arith.constant 0 : index
    %36 = vector.load %arg2[%c17, %c0_8] : memref<18x32xf32, #tpu.memory_space<vmem>>, vector<1x32xf32>
    %37 = arith.addf %5, %34 : vector<16x32xf32>
    %cst_9 = arith.constant dense<0.000000e+00> : vector<16xf32>
    %38 = vector.multi_reduction <add>, %37, %cst_9 [1] : vector<16x32xf32> to vector<16xf32>
    %39 = vector.shape_cast %38 : vector<16xf32> to vector<16x1xf32>
    %cst_10 = arith.constant 3.200000e+01 : f32
    %40 = vector.broadcast %cst_10 : f32 to vector<16x1xf32>
    %41 = arith.divf %39, %40 : vector<16x1xf32>
    %42 = vector.broadcast %41 : vector<16x1xf32> to vector<16x32xf32>
    %43 = arith.subf %37, %42 : vector<16x32xf32>
    %44 = arith.mulf %43, %43 : vector<16x32xf32>
    %cst_11 = arith.constant dense<0.000000e+00> : vector<16xf32>
    %45 = vector.multi_reduction <add>, %44, %cst_11 [1] : vector<16x32xf32> to vector<16xf32>
    %46 = vector.shape_cast %45 : vector<16xf32> to vector<16x1xf32>
    %cst_12 = arith.constant 3.200000e+01 : f32
    %47 = vector.broadcast %cst_12 : f32 to vector<16x1xf32>
    %48 = arith.divf %46, %47 : vector<16x1xf32>
    %cst_13 = arith.constant 9.99999974E-6 : f32
    %49 = vector.broadcast %cst_13 : f32 to vector<16x1xf32>
    %50 = arith.addf %48, %49 : vector<16x1xf32>
    %51 = math.rsqrt %50 : vector<16x1xf32>
    %52 = vector.broadcast %51 : vector<16x1xf32> to vector<16x32xf32>
    %53 = arith.mulf %43, %52 : vector<16x32xf32>
    %54 = vector.broadcast %35 : vector<1x32xf32> to vector<16x32xf32>
    %55 = arith.mulf %53, %54 : vector<16x32xf32>
    %56 = vector.broadcast %36 : vector<1x32xf32> to vector<16x32xf32>
    %57 = arith.addf %55, %56 : vector<16x32xf32>
    %c0_14 = arith.constant 0 : index
    %c0_15 = arith.constant 0 : index
    %58 = vector.load %arg3[%c0_14, %c0_15] : memref<32x96xf32, #tpu.memory_space<vmem>>, vector<32x96xf32>
    %cst_16 = arith.constant dense<0.000000e+00> : vector<16x96xf32>
    %59 = tpu.matmul %57, %58, %cst_16 {dimension_numbers = #tpu.dot_dimension_numbers<[1], [0], [0], [1], [0, 0, 1, 1], [], []>} : vector<16x32xf32>, vector<32x96xf32>, vector<16x96xf32> -> vector<16x96xf32>
    %c0_17 = arith.constant 0 : index
    %c0_18 = arith.constant 0 : index
    %60 = vector.load %arg4[%c0_17, %c0_18] : memref<16x128xf32, #tpu.memory_space<vmem>>, vector<16x32xf32>
    tpu.vector_store %arg4[%c0_17, %c0_18], %57 {strides = array<i32>} : memref<16x128xf32, #tpu.memory_space<vmem>>, vector<16x32xf32>,
    %c0_19 = arith.constant 0 : index
    %c32 = arith.constant 32 : index
    %61 = vector.load %arg4[%c0_19, %c32] : memref<16x128xf32, #tpu.memory_space<vmem>>, vector<16x96xf32>
    tpu.vector_store %arg4[%c0_19, %c32], %59 {strides = array<i32>} : memref<16x128xf32, #tpu.memory_space<vmem>>, vector<16x96xf32>,
    return
  }
}

</mosaic_0001>

<llo_original>
// kernel: language_model_forward.1
$region0: #{language_model_forward.1}
  #allocation0 [shape = 'u32[]', space=smem, size = 0x4, offset = 0x4, fixed_abs, tag = 'smem constant byte address 0x4 - core index']
  #allocation1 [shape = 'u32[144,128]{1,0:T(1,128)}', space=vmem, size = 0x12000, scoped, tag = 'internal scratch']
  %s0 = inlined_call_operand.vmem [shape: s32[1,16], index: 0, kind: input, shape index: {}]
  %s1 = inlined_call_operand.hbm [shape: f32[16,32], index: 1, kind: input, shape index: {}]
  %s2 = inlined_call_operand.hbm [shape: f32[18,32], index: 2, kind: input, shape index: {}]
  %s3 = inlined_call_operand.hbm [shape: f32[32,96], index: 3, kind: input, shape index: {}]
  %s4 = inlined_call_operand.vmem [shape: f32[16,128], index: 4, kind: output, shape index: {}]
  %s5 = sld [smem:[#allocation0]]
  $region38: #{language_model_forward.1} parent=0
    _
  %s7 = ssub.s32 1, %s5
  %s8 = scalar_select 0, %s7, %s5
  $region1: #{language_model_forward.1} parent=0
    #allocation2 [shape = 'u8[8192]{0}', space=vmem, size = 0x2000, scoped, tag = 'input window, operand 1, single buffered']
    #allocation3 [shape = 's32[1]{0}', space=sflag, size = 0x4, scoped, tag = 'scoped memory for language_model_forward.1']
    #allocation4 [shape = 'u8[12288]{0}', space=vmem, size = 0x3000, scoped, tag = 'input window, operand 2, single buffered']
    #allocation5 [shape = 's32[1]{0}', space=sflag, size = 0x4, scoped, tag = 'scoped memory for language_model_forward.1']
    #allocation6 [shape = 'u8[16384]{0}', space=vmem, size = 0x4000, scoped, tag = 'input window, operand 3, single buffered']
    %9 = vsyncpa [#allocation3], 0
    %10 = vsyncpa [#allocation5], 0
    // Predicated region
    $region2: #{language_model_forward.1} parent=1 // pred_check
      _
    $region3: #{language_model_forward.1} parent=1 // pred_check_branch
      %12 = sbr.rel (0) target = $region5
    $region4: #{language_model_forward.1} parent=1 // pred_region
      _
    $region5: #{language_model_forward.1} parent=1 // pred_fallthru
      _
    // Predicated region
    $region6: #{language_model_forward.1} parent=1 // pred_check
      _
    $region7: #{language_model_forward.1} parent=1 // pred_check_branch
      %14 = sbr.rel (0) target = $region9
    $region8: #{language_model_forward.1} parent=1 // pred_region
      %s16 = ssub.s32 256, 256
      %17 = vsyncadd [#allocation3], %s16
      %s18 = sshll.u32 [#allocation2], 4
      %s19 = int_to_ptr.vmem [resolvable:$true] %s18
      %24 = dma.hbm_to_vmem [thread:$0]  %s1, 256, %s19, [#allocation3], 128, 128, 8
    $region9: #{language_model_forward.1} parent=1 // pred_fallthru
      _
    // Predicated region
    $region10: #{language_model_forward.1} parent=1 // pred_check
      _
    $region11: #{language_model_forward.1} parent=1 // pred_check_branch
      %26 = sbr.rel (0) target = $region13
    $region12: #{language_model_forward.1} parent=1 // pred_region
      %s28 = ssub.s32 384, 384
      %29 = vsyncadd [#allocation5], %s28
      %s30 = sshll.u32 [#allocation4], 4
      %s31 = int_to_ptr.vmem [resolvable:$true] %s30
      %36 = dma.hbm_to_vmem [thread:$0]  %s2, 384, %s31, [#allocation5], 128, 128, 8
    $region13: #{language_model_forward.1} parent=1 // pred_fallthru
      _
    // Predicated region
    $region14: #{language_model_forward.1} parent=1 // pred_check
      _
    $region15: #{language_model_forward.1} parent=1 // pred_check_branch
      %38 = sbr.rel (0) target = $region17
    $region16: #{language_model_forward.1} parent=1 // pred_region
      %s40 = ssub.s32 512, 512
      %41 = vsyncadd [#allocation5], %s40
      %s42 = sshll.u32 [#allocation6], 4
      %s43 = int_to_ptr.vmem [resolvable:$true] %s42
      %48 = dma.hbm_to_vmem [thread:$0]  %s3, 512, %s43, [#allocation5], 128, 128, 8
    $region17: #{language_model_forward.1} parent=1 // pred_fallthru
      _
    // Predicated region
    $region18: #{language_model_forward.1} parent=1 // pred_check
      _
    $region19: #{language_model_forward.1} parent=1 // pred_check_branch
      %50 = sbr.rel (0) target = $region21
    $region20: #{language_model_forward.1} parent=1 // pred_region
      %51 = dma.done [#allocation3], 256
    $region21: #{language_model_forward.1} parent=1 // pred_fallthru
      _
    // Predicated region
    $region22: #{language_model_forward.1} parent=1 // pred_check
      _
    $region23: #{language_model_forward.1} parent=1 // pred_check_branch
      %53 = sbr.rel (0) target = $region25
    $region24: #{language_model_forward.1} parent=1 // pred_region
      %54 = dma.done [#allocation5], 384
    $region25: #{language_model_forward.1} parent=1 // pred_fallthru
      _
    // Predicated region
    $region26: #{language_model_forward.1} parent=1 // pred_check
      _
    $region27: #{language_model_forward.1} parent=1 // pred_check_branch
      %56 = sbr.rel (0) target = $region29
    $region28: #{language_model_forward.1} parent=1 // pred_region
      %57 = dma.done [#allocation5], 512
    $region29: #{language_model_forward.1} parent=1 // pred_fallthru
      _
    %v58 = vld [vmem:[%s0] sm:$0x1]
    %vm59 = vcmp.ne.s32.totalorder %v58, 0
    %v60 = vsel %vm59, 1, 0
    %v61 = vcvt.s32.f32 %v60
    %v62 = vld [vmem:[#allocation2] sm:$0xff]
    %v63 = vld [vmem:[#allocation2 + $0x8] sm:$0xff]
    %v64 = vlaneseq
    %v65 = vshrl.u32 %v64, 7
    %v66 = vadd.s32 %v65, 8
    %v67 = vlaneseq
    %v68 = vand.u32 %v67, 127
    %v69 = vxor.u32 %v65, %v68
    %v70 = vxor.u32 %v66, %v68
    %vm71 = vcmp.lt.s32.totalorder %v69, 8
    %vm72 = vcmp.lt.s32.totalorder %v70, 8
    %vm73 = vcmp.le.s32.totalorder %v68, %v65
    %vm74 = vcmp.le.s32.totalorder %v68, %v66
    %vm75 = vmand %vm73, %vm71
    %vm76 = vmand %vm74, %vm72
    %v77 = vsel %vm75, 1, 0
    %v78 = vsel %vm76, 1, 0
    %v79 = vcvt.s32.f32 %v77
    %v80 = vcvt.s32.f32 %v78
    %vm81 = vcmp.eq.s32.totalorder %v68, %v65
    %vm82 = vcmp.eq.s32.totalorder %v68, %v66
    %v83 = vsel %vm81, 1, 0
    %v84 = vsel %vm82, 1, 0
    %v85 = vcvt.s32.f32 %v83
    %v86 = vcvt.s32.f32 %v84
    %v88 = vlaneseq
    %v89 = vshrl.u32 %v88, 7
    %v90 = vsub.s32 0, %v89
    %v91 = vrot.slane %v61, %v90
    %v93 = vmul.f32 %v79, %v91
    %v94 = vmul.f32 %v80, %v91
    %vm95 = vcmask 130048
    %v96 = vsel %vm95, %v93, 0.0
    %97 = vadd.xlane.f32.xlu0 %v96
    %v98 = vpop.xlane.xlu0 %97
    %v99 = vsel %vm95, %v94, 0.0
    %100 = vadd.xlane.f32.xlu0 %v99
    %v101 = vpop.xlane.xlu0 %100
    %v102 = vmul.f32 %v85, %v91
    %v103 = vmul.f32 %v86, %v91
    %v104 = vsel %vm95, %v102, 0.0
    %105 = vadd.xlane.f32.xlu0 %v104
    %v106 = vpop.xlane.xlu0 %105
    %v107 = vsel %vm95, %v103, 0.0
    %108 = vadd.xlane.f32.xlu0 %v107
    %v109 = vpop.xlane.xlu0 %108
    %v110 = vmul.f32 %v98, %v106
    %v111 = vmul.f32 %v101, %v109
    %v112 = vcvt.f32.s32.to.zero.pseudo %v110
    %v113 = vcvt.f32.s32.to.zero.pseudo %v111
    %vm114 = vcmp.eq.s32.totalorder %v112, %v68
    %vm115 = vcmp.eq.s32.totalorder %v113, %v68
    %v116 = vsel %vm114, 1, 0
    %v117 = vsel %vm115, 1, 0
    %v118 = vcvt.s32.f32 %v116
    %v119 = vcvt.s32.f32 %v117
    %v120 = vld [vmem:[#allocation4] sm:$0xff]
    %v121 = vld [vmem:[#allocation4 + $0x8] sm:$0xff]
    %v123 = vsel %vm95, %v118, 0
    %v126 = vsel %vm95, %v119, 0
    %128 = vmatprep.subr.mxu0 0.0
    %129 = vmatpush1.msra.mxu0 %v120
    %130 = vmatprep.subr.mxu0 0.0
    %131 = vmatpush1.msra.mxu0 %v121
    %132 = vmatprep.subr.mxu0 0.0
    %133 = vmatpush1.msra.mxu0 0.0
    %134 = vmatprep.subr.mxu0 0.0
    %135 = vmatpush1.msra.mxu0 0.0
    %136 = vmatprep.subr.mxu0 0.0
    %137 = vmatpush1.msra.mxu0 0.0
    %138 = vmatprep.subr.mxu0 0.0
    %139 = vmatpush1.msra.mxu0 0.0
    %140 = vmatprep.subr.mxu0 0.0
    %141 = vmatpush1.msra.mxu0 0.0
    %142 = vmatprep.subr.mxu0 0.0
    %143 = vmatpush1.msra.mxu0 0.0
    %144 = vmatprep.subr.mxu0 0.0
    %145 = vmatpush1.msra.mxu0 0.0
    %146 = vmatprep.subr.mxu0 0.0
    %147 = vmatpush1.msra.mxu0 0.0
    %148 = vmatprep.subr.mxu0 0.0
    %149 = vmatpush1.msra.mxu0 0.0
    %150 = vmatprep.subr.mxu0 0.0
    %151 = vmatpush1.msra.mxu0 0.0
    %152 = vmatprep.subr.mxu0 0.0
    %153 = vmatpush1.msra.mxu0 0.0
    %154 = vmatprep.subr.mxu0 0.0
    %155 = vmatpush1.msra.mxu0 0.0
    %156 = vmatprep.subr.mxu0 0.0
    %157 = vmatpush1.msra.mxu0 0.0
    %158 = vmatprep.subr.mxu0 0.0
    %159 = vmatpush1.msra.mxu0 0.0
    %160 = vmatprep.subr.mxu0 0.0
    %161 = vmatpush1.msra.mxu0 0.0
    %162 = vmatprep.subr.mxu0 0.0
    %163 = vmatpush1.msra.mxu0 0.0
    %164 = vmatprep.subr.mxu0 0.0
    %165 = vmatpush1.msra.mxu0 0.0
    %166 = vmatprep.subr.mxu0 0.0
    %167 = vmatpush1.msra.mxu0 0.0
    %168 = vmatprep.subr.mxu0 0.0
    %169 = vmatpush1.msra.mxu0 0.0
    %170 = vmatprep.subr.mxu0 0.0
    %171 = vmatpush1.msra.mxu0 0.0
    %172 = vmatprep.subr.mxu0 0.0
    %173 = vmatpush1.msra.mxu0 0.0
    %174 = vmatprep.subr.mxu0 0.0
    %175 = vmatpush1.msra.mxu0 0.0
    %176 = vmatprep.subr.mxu0 0.0
    %177 = vmatpush1.msra.mxu0 0.0
    %178 = vmatprep.subr.mxu0 0.0
    %179 = vmatpush1.msra.mxu0 0.0
    %180 = vmatprep.subr.mxu0 0.0
    %181 = vmatpush1.msra.mxu0 0.0
    %182 = vmatprep.subr.mxu0 0.0
    %183 = vmatpush1.msra.mxu0 0.0
    %184 = vmatprep.subr.mxu0 0.0
    %185 = vmatpush1.msra.mxu0 0.0
    %186 = vmatprep.subr.mxu0 0.0
    %187 = vmatpush1.msra.mxu0 0.0
    %188 = vmatprep.subr.mxu0 0.0
    %189 = vmatpush1.msra.mxu0 0.0
    %190 = vmatprep.subr.mxu0 0.0
    %191 = vmatpush1.msra.mxu0 0.0
    %192 = vmatprep.mubr.f32.mxu0 0.0
    %193 = vmatmul.mubr.f32.gmra.mrb[0].mxu0 %v123
    %v194 = vpop.f32.mrb[0].mxu0
    %v195 = vadd.f32 0.0, %v194
    %v196 = vpop.f32.mrb[0].mxu0
    %197 = vmatprep.mubr.f32.mxu0 0.0
    %198 = vmatmul.mubr.f32.gmra.mrb[0].mxu0 %v126
    %v199 = vpop.f32.mrb[0].mxu0
    %v200 = vadd.f32 0.0, %v199
    %v201 = vpop.f32.mrb[0].mxu0
    %202 = vdwg.mxu0
    %v203 = vld [vmem:[#allocation4 + $0x10] sm:$0x1]
    %v204 = vld [vmem:[#allocation4 + $0x11] sm:$0x1]
    %v205 = vadd.f32 %v62, %v195
    %v206 = vadd.f32 %v63, %v200
    %vm207 = vcmask 261120
    %v208 = vsel %vm207, %v205, 0.0
    %209 = vadd.xlane.f32.xlu0 %v208
    %v210 = vpop.xlane.xlu0 %209
    %v211 = vsel %vm207, %v206, 0.0
    %212 = vadd.xlane.f32.xlu0 %v211
    %v213 = vpop.xlane.xlu0 %212
    %v214 = vrcp.pop 32.0
    %v215 = vmul.f32 %v210, %v214
    %v216 = vmul.f32 %v213, %v214
    %v217 = vsub.f32 %v205, %v215
    %v218 = vsub.f32 %v206, %v216
    %v219 = vmul.f32 %v217, %v217
    %v220 = vmul.f32 %v218, %v218
    %v221 = vsel %vm207, %v219, 0.0
    %222 = vadd.xlane.f32.xlu0 %v221
    %v223 = vpop.xlane.xlu0 %222
    %v224 = vsel %vm207, %v220, 0.0
    %225 = vadd.xlane.f32.xlu0 %v224
    %v226 = vpop.xlane.xlu0 %225
    %v227 = vmul.f32 %v223, %v214
    %v228 = vmul.f32 %v226, %v214
    %v229 = vadd.f32 %v227, 1e-05
    %v230 = vadd.f32 %v228, 1e-05
    %v231 = vrsqrt.pop %v229
    %v232 = vrsqrt.pop %v230
    %v233 = vmul.f32 %v217, %v231
    %v234 = vmul.f32 %v218, %v232
    %v235 = vlaneseq
    %v236 = vshrl.u32 %v235, 7
    %v237 = vsub.s32 0, %v236
    %v238 = vrot.slane %v203, %v237
    %v239 = vmul.f32 %v233, %v238
    %v240 = vmul.f32 %v234, %v238
    %v241 = vlaneseq
    %v242 = vshrl.u32 %v241, 7
    %v243 = vsub.s32 0, %v242
    %v244 = vrot.slane %v204, %v243
    %v245 = vadd.f32 %v239, %v244
    %v246 = vadd.f32 %v240, %v244
    %v247 = vld [vmem:[#allocation6] sm:$0xff]
    %v248 = vld [vmem:[#allocation6 + $0x8] sm:$0xff]
    %v249 = vld [vmem:[#allocation6 + $0x10] sm:$0xff]
    %v250 = vld [vmem:[#allocation6 + $0x18] sm:$0xff]
    %v252 = vsel %vm207, %v245, 0
    %v255 = vsel %vm207, %v246, 0
    %257 = vmatprep.subr.mxu0 0.0
    %258 = vmatpush1.msra.mxu0 %v247
    %259 = vmatprep.subr.mxu0 0.0
    %260 = vmatpush1.msra.mxu0 %v248
    %261 = vmatprep.subr.mxu0 0.0
    %262 = vmatpush1.msra.mxu0 %v249
    %263 = vmatprep.subr.mxu0 0.0
    %264 = vmatpush1.msra.mxu0 %v250
    %265 = vmatprep.subr.mxu0 0.0
    %266 = vmatpush1.msra.mxu0 0.0
    %267 = vmatprep.subr.mxu0 0.0
    %268 = vmatpush1.msra.mxu0 0.0
    %269 = vmatprep.subr.mxu0 0.0
    %270 = vmatpush1.msra.mxu0 0.0
    %271 = vmatprep.subr.mxu0 0.0
    %272 = vmatpush1.msra.mxu0 0.0
    %273 = vmatprep.subr.mxu0 0.0
    %274 = vmatpush1.msra.mxu0 0.0
    %275 = vmatprep.subr.mxu0 0.0
    %276 = vmatpush1.msra.mxu0 0.0
    %277 = vmatprep.subr.mxu0 0.0
    %278 = vmatpush1.msra.mxu0 0.0
    %279 = vmatprep.subr.mxu0 0.0
    %280 = vmatpush1.msra.mxu0 0.0
    %281 = vmatprep.subr.mxu0 0.0
    %282 = vmatpush1.msra.mxu0 0.0
    %283 = vmatprep.subr.mxu0 0.0
    %284 = vmatpush1.msra.mxu0 0.0
    %285 = vmatprep.subr.mxu0 0.0
    %286 = vmatpush1.msra.mxu0 0.0
    %287 = vmatprep.subr.mxu0 0.0
    %288 = vmatpush1.msra.mxu0 0.0
    %289 = vmatprep.subr.mxu0 0.0
    %290 = vmatpush1.msra.mxu0 0.0
    %291 = vmatprep.subr.mxu0 0.0
    %292 = vmatpush1.msra.mxu0 0.0
    %293 = vmatprep.subr.mxu0 0.0
    %294 = vmatpush1.msra.mxu0 0.0
    %295 = vmatprep.subr.mxu0 0.0
    %296 = vmatpush1.msra.mxu0 0.0
    %297 = vmatprep.subr.mxu0 0.0
    %298 = vmatpush1.msra.mxu0 0.0
    %299 = vmatprep.subr.mxu0 0.0
    %300 = vmatpush1.msra.mxu0 0.0
    %301 = vmatprep.subr.mxu0 0.0
    %302 = vmatpush1.msra.mxu0 0.0
    %303 = vmatprep.subr.mxu0 0.0
    %304 = vmatpush1.msra.mxu0 0.0
    %305 = vmatprep.subr.mxu0 0.0
    %306 = vmatpush1.msra.mxu0 0.0
    %307 = vmatprep.subr.mxu0 0.0
    %308 = vmatpush1.msra.mxu0 0.0
    %309 = vmatprep.subr.mxu0 0.0
    %310 = vmatpush1.msra.mxu0 0.0
    %311 = vmatprep.subr.mxu0 0.0
    %312 = vmatpush1.msra.mxu0 0.0
    %313 = vmatprep.subr.mxu0 0.0
    %314 = vmatpush1.msra.mxu0 0.0
    %315 = vmatprep.subr.mxu0 0.0
    %316 = vmatpush1.msra.mxu0 0.0
    %317 = vmatprep.subr.mxu0 0.0
    %318 = vmatpush1.msra.mxu0 0.0
    %319 = vmatprep.subr.mxu0 0.0
    %320 = vmatpush1.msra.mxu0 0.0
    %321 = vmatprep.mubr.f32.mxu0 0.0
    %322 = vmatmul.mubr.f32.gmra.mrb[0].mxu0 %v252
    %v323 = vpop.f32.mrb[0].mxu0
    %v324 = vadd.f32 0.0, %v323
    %v325 = vpop.f32.mrb[0].mxu0
    %326 = vmatprep.mubr.f32.mxu0 0.0
    %327 = vmatmul.mubr.f32.gmra.mrb[0].mxu0 %v255
    %v328 = vpop.f32.mrb[0].mxu0
    %v329 = vadd.f32 0.0, %v328
    %v330 = vpop.f32.mrb[0].mxu0
    %331 = vdwg.mxu0
    %332 = vst.msk [vmem:[%s4] sm:$0xff] %vm207, %v245
    %333 = vst.msk [vmem:[%s4 + $0x8] sm:$0xff] %vm207, %v246
    %336 = vrot.lane.b32.xlu0 %v324, 32
    %v337 = vpop.permute.xlu0 %336
    %338 = vrot.lane.b32.xlu0 %v329, 32
    %v339 = vpop.permute.xlu0 %338
    %vm342 = vcmask 1047808
    %343 = vst.msk [vmem:[%s4] sm:$0xff] %vm342, %v337
    %344 = vst.msk [vmem:[%s4 + $0x8] sm:$0xff] %vm342, %v339
    // Predicated region
    $region30: #{language_model_forward.1} parent=1 // pred_check
      _
    $region31: #{language_model_forward.1} parent=1 // pred_check_branch
      %346 = sbr.rel (0) target = $region33
    $region32: #{language_model_forward.1} parent=1 // pred_region
      _
    $region33: #{language_model_forward.1} parent=1 // pred_fallthru
      _
    // Predicated region
    $region34: #{language_model_forward.1} parent=1 // pred_check
      _
    $region35: #{language_model_forward.1} parent=1 // pred_check_branch
      %348 = sbr.rel (0) target = $region37
    $region36: #{language_model_forward.1} parent=1 // pred_region
      _
    $region37: #{language_model_forward.1} parent=1 // pred_fallthru
      _
    %349 = vsyncpa [#allocation3], 1
    %350 = vsyncpa [#allocation5], 1

</llo_original>
